<compile_context>
chip_gen: v6e
topology: v6e:2x2x1
jax: 0.10.0
libtpu: 0.0.40
codegen_flags: <defaults>
</compile_context>

<pallas_src>
import jax
import jax.numpy as jnp
from jax.experimental import pallas as pl
from jax.experimental.pallas import tpu as pltpu

# Token-vocab tags (TV.LLM / TV.COD in the original code).
TV_LLM = 0
TV_COD = 1


def _round_up(x, m):
    return ((x + m - 1) // m) * m


def dense_code_gather_kernel(llm_ids_ref, cod_ids_ref, tab_hbm, out_ref,
                             lbuf, cbuf, sem):
    """Row-gather one token block: out[t] = table[llm_id[t]] + table[cod_id[t]].

    llm_ids_ref / cod_ids_ref : (n_pad,) int32 in SMEM (scalar prefetch).
    tab_hbm                   : (v_rows, d_pad) f32 in HBM (pl.ANY).
    out_ref                   : (block_n, d_pad) f32 VMEM output tile.
    lbuf / cbuf               : (2, 1, d_pad) f32 VMEM double buffers.
    sem                       : (2, 2) DMA semaphores.
    """
    block_n = out_ref.shape[0]
    base = pl.program_id(0) * block_n

    def start_fetch(t, slot):
        g = base + t
        pltpu.make_async_copy(tab_hbm.at[pl.ds(llm_ids_ref[g], 1), :],
                              lbuf.at[slot], sem.at[slot, 0]).start()
        pltpu.make_async_copy(tab_hbm.at[pl.ds(cod_ids_ref[g], 1), :],
                              cbuf.at[slot], sem.at[slot, 1]).start()

    # Prime the pipeline with token 0 into slot 0.
    start_fetch(0, 0)

    @pl.loop(0, block_n)
    def _(t):
        slot = t & 1

        # Prefetch next token's two rows into the other slot (overlap).
        @pl.when(t + 1 < block_n)
        def _():
            start_fetch(t + 1, 1 - slot)

        pltpu.make_async_copy(tab_hbm.at[pl.ds(0, 1), :], lbuf.at[slot],
                              sem.at[slot, 0]).wait()
        pltpu.make_async_copy(tab_hbm.at[pl.ds(0, 1), :], cbuf.at[slot],
                              sem.at[slot, 1]).wait()

        out_ref[pl.ds(t, 1), :] = lbuf[slot] + cbuf[slot]


def prepare_fused_table(llm_table, code_table):
    """One-time (init / parameter-load) fusion of the two embedding tables."""
    v_llm, dim = llm_table.shape
    v_cod, dim2 = code_table.shape
    assert dim == dim2
    v_total = v_llm + v_cod
    d_pad = _round_up(dim, 128)
    v_rows = _round_up(v_total + 1, 8)          # >= 1 guaranteed-zero row
    table = jnp.zeros((v_rows, d_pad), jnp.float32)
    table = table.at[:v_llm, :dim].set(llm_table.astype(jnp.float32))
    table = table.at[v_llm:v_total, :dim].set(code_table.astype(jnp.float32))
    zero_row = v_total                          # masked tokens gather this row
    return table, v_llm, zero_row, dim


def _get_inputs(input_ids, vocab_ids, length):
    """Pure-JAX glue equivalent of DenseCodeEmbeddingLayer.get_inputs()."""
    bsz, max_len = input_ids.shape
    attention_mask = (jnp.arange(max_len, dtype=jnp.int32)[None, :]
                      < length[:, None])
    llm_mask = (vocab_ids == TV_LLM) & attention_mask
    code_mask = (vocab_ids == TV_COD) & attention_mask
    llm_input = jnp.where(llm_mask, input_ids, 0)
    code_input = jnp.where(code_mask, input_ids, 0)
    return dict(llm_mask=llm_mask, code_mask=code_mask, llm_input=llm_input,
                code_input=code_input, attention_mask=attention_mask)


def dense_code_embedding_forward(input_ids, vocab_ids, length,
                                 fused_table, v_llm, zero_row, dim,
                                 *, block_n=256):
    """Equivalent of DenseCodeEmbeddingLayer.forward()."""
    out = _get_inputs(input_ids, vocab_ids, length)
    bsz, seq = input_ids.shape
    n = bsz * seq
    v_rows, d_pad = fused_table.shape

    # Gather indices into the fused table; out-of-attention tokens point at
    # the guaranteed-zero row, so the kernel needs no mask multiply.
    attn = out['attention_mask'].reshape(-1)
    llm_gid = jnp.where(attn, out['llm_input'].reshape(-1),
                        zero_row).astype(jnp.int32)
    cod_gid = jnp.where(attn, out['code_input'].reshape(-1) + v_llm,
                        zero_row).astype(jnp.int32)

    block_n = min(block_n, _round_up(n, 8))
    n_pad = _round_up(n, block_n)
    llm_gid = jnp.pad(llm_gid, (0, n_pad - n), constant_values=zero_row)
    cod_gid = jnp.pad(cod_gid, (0, n_pad - n), constant_values=zero_row)

    grid = (n_pad // block_n,)

    # VMEM budget from the actual tiles (output tile is double-buffered).
    out_tile_bytes = block_n * d_pad * 4
    row_buf_bytes = 2 * (2 * 1 * d_pad * 4)
    vmem_limit = int(min(100 * 1024 * 1024,
                         max(8 * 1024 * 1024,
                             2 * out_tile_bytes + row_buf_bytes
                             + 4 * 1024 * 1024)))

    emb_pad = pl.pallas_call(
        dense_code_gather_kernel,
        out_shape=jax.ShapeDtypeStruct((n_pad, d_pad), jnp.float32),
        grid_spec=pltpu.PrefetchScalarGridSpec(
            num_scalar_prefetch=2,
            grid=grid,
            in_specs=[pl.BlockSpec(memory_space=pl.ANY)],      # fused table (HBM)
            out_specs=pl.BlockSpec((block_n, d_pad),
                                   lambda i, llm, cod: (i, 0)),
            scratch_shapes=[
                pltpu.VMEM((2, 1, d_pad), jnp.float32),        # llm row dbl-buf
                pltpu.VMEM((2, 1, d_pad), jnp.float32),        # cod row dbl-buf
                pltpu.SemaphoreType.DMA((2, 2)),
            ]),
        compiler_params=pltpu.CompilerParams(
            dimension_semantics=("parallel",),
            vmem_limit_bytes=vmem_limit,
        ),
        cost_estimate=pl.CostEstimate(
            flops=n_pad * d_pad,
            transcendentals=0,
            bytes_accessed=3 * n_pad * d_pad * 4 + 2 * n_pad * 4),
    )(llm_gid, cod_gid, fused_table)

    input_embeddings = emb_pad[:n, :dim].reshape(bsz, seq, dim)
    return dict(**out, input_embeddings=input_embeddings)


if __name__ == "__main__":
    # Small shapes consistent with the module's forward.
    B, L, D = 2, 8, 32
    V_LLM, V_COD = 64, 16

    key = jax.random.PRNGKey(0)
    k1, k2, k3, k4, _ = jax.random.split(key, 5)

    # Deterministic "nn.Embedding" weights (N(0,1) init, like PyTorch default).
    llm_table = jax.random.normal(k1, (V_LLM, D), dtype=jnp.float32)
    code_table = jax.random.normal(k2, (V_COD, D), dtype=jnp.float32)

    # Batch: token ids, per-token vocab tags, per-sequence lengths.
    input_ids = jax.random.randint(k3, (B, L), 0, V_COD, dtype=jnp.int32)
    vocab_ids = jax.random.randint(k4, (B, L), 0, 3, dtype=jnp.int32)  # {LLM, COD, other}
    length = jnp.array([6, 8], dtype=jnp.int32)

    # Hoisted one-time table fusion (init / parameter-load time, review #3).
    fused_table, v_llm, zero_row, dim = prepare_fused_table(llm_table,
                                                            code_table)
    fused_table = jax.block_until_ready(fused_table)

    result = dense_code_embedding_forward(input_ids, vocab_ids, length,
                                          fused_table, v_llm, zero_row, dim)
    emb = jax.block_until_ready(result['input_embeddings'])

    # Pure-JAX reference (exact semantics of the PyTorch forward).
    ref_inputs = _get_inputs(input_ids, vocab_ids, length)
    ref = (jnp.take(llm_table, ref_inputs['llm_input'], axis=0)
           + jnp.take(code_table, ref_inputs['code_input'], axis=0))
    ref = ref * ref_inputs['attention_mask'][..., None].astype(jnp.float32)

    assert emb.shape == (B, L, D)
    assert jnp.allclose(emb, ref, atol=1e-6, rtol=0.0)   # gather path is exact
    print("KERNEL_OK")
</pallas_src>

<mosaic_0001>
module attributes {stable_mosaic.version = 11 : i64} {
  func.func @dense_code_gather_kernel(%arg0: i32, %arg1: memref<16xi32, #tpu.memory_space<smem>>, %arg2: memref<16xi32, #tpu.memory_space<smem>>, %arg3: memref<88x128xf32, #tpu.memory_space<any>>, %arg4: memref<16x128xf32, #tpu.memory_space<vmem>>, %arg5: memref<2x1x128xf32, #tpu.memory_space<vmem>>, %arg6: memref<2x1x128xf32, #tpu.memory_space<vmem>>, %arg7: memref<2x2x!tpu.dma_semaphore, #tpu.memory_space<semaphore_mem>>) attributes {dimension_semantics = [#tpu.dimension_semantics<parallel>], iteration_bounds = array<i64: 1>, scalar_prefetch = 2 : i64, scratch_operands = 3 : i64, tpu.core_type = #tpu.core_type<tc>, window_params = [{}, {transform_indices = @transform_1, window_bounds = array<i64: 16, 128>}]} {
    %c16_i32 = arith.constant 16 : i32
    %0 = arith.muli %arg0, %c16_i32 : i32
    %c0_i32 = arith.constant 0 : i32
    %1 = arith.addi %0, %c0_i32 : i32
    %2 = arith.index_cast %1 : i32 to index
    %3 = memref.load %arg1[%2] : memref<16xi32, #tpu.memory_space<smem>>
    %c0_i32_0 = arith.constant 0 : i32
    %c0_i32_1 = arith.constant 0 : i32
    %c0_i32_2 = arith.constant 0 : i32
    %c0_i32_3 = arith.constant 0 : i32
    %4 = tpu.memref_slice %arg3[%3, %c0_i32_3] : memref<88x128xf32, #tpu.memory_space<any>> -> memref<1x128xf32, #tpu.memory_space<any>>
    %c0_i32_4 = arith.constant 0 : i32
    %c0_i32_5 = arith.constant 0 : i32
    %5 = tpu.memref_slice %arg5[%c0_i32_0, %c0_i32_4, %c0_i32_5] : memref<2x1x128xf32, #tpu.memory_space<vmem>> -> memref<1x1x128xf32, #tpu.memory_space<vmem>>
    %6 = tpu.memref_squeeze %5 : memref<1x1x128xf32, #tpu.memory_space<vmem>> -> memref<1x128xf32, #tpu.memory_space<vmem>>
    %7 = tpu.memref_slice %arg7[%c0_i32_1, %c0_i32_2] : memref<2x2x!tpu.dma_semaphore, #tpu.memory_space<semaphore_mem>> -> memref<1x1x!tpu.dma_semaphore, #tpu.memory_space<semaphore_mem>>
    %8 = tpu.memref_squeeze %7 : memref<1x1x!tpu.dma_semaphore, #tpu.memory_space<semaphore_mem>> -> memref<!tpu.dma_semaphore, #tpu.memory_space<semaphore_mem>>
    tpu.enqueue_dma source(%4 : memref<1x128xf32, #tpu.memory_space<any>>) target(%6 : memref<1x128xf32, #tpu.memory_space<vmem>>) target_semaphore(%8 : memref<!tpu.dma_semaphore, #tpu.memory_space<semaphore_mem>>)
    %9 = arith.index_cast %1 : i32 to index
    %10 = memref.load %arg2[%9] : memref<16xi32, #tpu.memory_space<smem>>
    %c0_i32_6 = arith.constant 0 : i32
    %c0_i32_7 = arith.constant 0 : i32
    %c1_i32 = arith.constant 1 : i32
    %c0_i32_8 = arith.constant 0 : i32
    %11 = tpu.memref_slice %arg3[%10, %c0_i32_8] : memref<88x128xf32, #tpu.memory_space<any>> -> memref<1x128xf32, #tpu.memory_space<any>>
    %c0_i32_9 = arith.constant 0 : i32
    %c0_i32_10 = arith.constant 0 : i32
    %12 = tpu.memref_slice %arg6[%c0_i32_6, %c0_i32_9, %c0_i32_10] : memref<2x1x128xf32, #tpu.memory_space<vmem>> -> memref<1x1x128xf32, #tpu.memory_space<vmem>>
    %13 = tpu.memref_squeeze %12 : memref<1x1x128xf32, #tpu.memory_space<vmem>> -> memref<1x128xf32, #tpu.memory_space<vmem>>
    %14 = tpu.memref_slice %arg7[%c0_i32_7, %c1_i32] : memref<2x2x!tpu.dma_semaphore, #tpu.memory_space<semaphore_mem>> -> memref<1x1x!tpu.dma_semaphore, #tpu.memory_space<semaphore_mem>>
    %15 = tpu.memref_squeeze %14 : memref<1x1x!tpu.dma_semaphore, #tpu.memory_space<semaphore_mem>> -> memref<!tpu.dma_semaphore, #tpu.memory_space<semaphore_mem>>
    tpu.enqueue_dma source(%11 : memref<1x128xf32, #tpu.memory_space<any>>) target(%13 : memref<1x128xf32, #tpu.memory_space<vmem>>) target_semaphore(%15 : memref<!tpu.dma_semaphore, #tpu.memory_space<semaphore_mem>>)
    %c0_i32_11 = arith.constant 0 : i32
    %c16_i32_12 = arith.constant 16 : i32
    %16 = arith.addi %c0_i32_11, %c16_i32_12 : i32
    %c1_i32_13 = arith.constant 1 : i32
    scf.for %arg8 = %c0_i32_11 to %16 step %c1_i32_13  : i32 {
      %c1_i32_15 = arith.constant 1 : i32
      %17 = arith.muli %arg8, %c1_i32_15 : i32
      %c0_i32_16 = arith.constant 0 : i32
      %18 = arith.addi %c0_i32_16, %17 : i32
      %c1_i32_17 = arith.constant 1 : i32
      %19 = arith.andi %18, %c1_i32_17 : i32
      %c1_i32_18 = arith.constant 1 : i32
      %20 = arith.addi %18, %c1_i32_18 : i32
      %c16_i32_19 = arith.constant 16 : i32
      %21 = arith.cmpi slt, %20, %c16_i32_19 : i32
      %22 = arith.extui %21 : i1 to i32
      %c0_i32_20 = arith.constant 0 : i32
      %23 = arith.cmpi ne, %22, %c0_i32_20 : i32
      scf.if %23 {
        %c1_i32_35 = arith.constant 1 : i32
        %43 = arith.addi %18, %c1_i32_35 : i32
        %c1_i32_36 = arith.constant 1 : i32
        %44 = arith.subi %c1_i32_36, %19 : i32
        %45 = arith.addi %0, %43 : i32
        %46 = arith.index_cast %45 : i32 to index
        %47 = memref.load %arg1[%46] : memref<16xi32, #tpu.memory_space<smem>>
        %c0_i32_37 = arith.constant 0 : i32
        %c0_i32_38 = arith.constant 0 : i32
        %48 = tpu.memref_slice %arg3[%47, %c0_i32_38] : memref<88x128xf32, #tpu.memory_space<any>> -> memref<1x128xf32, #tpu.memory_space<any>>
        %c0_i32_39 = arith.constant 0 : i32
        %c0_i32_40 = arith.constant 0 : i32
        %49 = tpu.memref_slice %arg5[%44, %c0_i32_39, %c0_i32_40] : memref<2x1x128xf32, #tpu.memory_space<vmem>> -> memref<1x1x128xf32, #tpu.memory_space<vmem>>
        %50 = tpu.memref_squeeze %49 : memref<1x1x128xf32, #tpu.memory_space<vmem>> -> memref<1x128xf32, #tpu.memory_space<vmem>>
        %51 = tpu.memref_slice %arg7[%44, %c0_i32_37] : memref<2x2x!tpu.dma_semaphore, #tpu.memory_space<semaphore_mem>> -> memref<1x1x!tpu.dma_semaphore, #tpu.memory_space<semaphore_mem>>
        %52 = tpu.memref_squeeze %51 : memref<1x1x!tpu.dma_semaphore, #tpu.memory_space<semaphore_mem>> -> memref<!tpu.dma_semaphore, #tpu.memory_space<semaphore_mem>>
        tpu.enqueue_dma source(%48 : memref<1x128xf32, #tpu.memory_space<any>>) target(%50 : memref<1x128xf32, #tpu.memory_space<vmem>>) target_semaphore(%52 : memref<!tpu.dma_semaphore, #tpu.memory_space<semaphore_mem>>)
        %53 = arith.index_cast %45 : i32 to index
        %54 = memref.load %arg2[%53] : memref<16xi32, #tpu.memory_space<smem>>
        %c1_i32_41 = arith.constant 1 : i32
        %c0_i32_42 = arith.constant 0 : i32
        %55 = tpu.memref_slice %arg3[%54, %c0_i32_42] : memref<88x128xf32, #tpu.memory_space<any>> -> memref<1x128xf32, #tpu.memory_space<any>>
        %c0_i32_43 = arith.constant 0 : i32
        %c0_i32_44 = arith.constant 0 : i32
        %56 = tpu.memref_slice %arg6[%44, %c0_i32_43, %c0_i32_44] : memref<2x1x128xf32, #tpu.memory_space<vmem>> -> memref<1x1x128xf32, #tpu.memory_space<vmem>>
        %57 = tpu.memref_squeeze %56 : memref<1x1x128xf32, #tpu.memory_space<vmem>> -> memref<1x128xf32, #tpu.memory_space<vmem>>
        %58 = tpu.memref_slice %arg7[%44, %c1_i32_41] : memref<2x2x!tpu.dma_semaphore, #tpu.memory_space<semaphore_mem>> -> memref<1x1x!tpu.dma_semaphore, #tpu.memory_space<semaphore_mem>>
        %59 = tpu.memref_squeeze %58 : memref<1x1x!tpu.dma_semaphore, #tpu.memory_space<semaphore_mem>> -> memref<!tpu.dma_semaphore, #tpu.memory_space<semaphore_mem>>
        tpu.enqueue_dma source(%55 : memref<1x128xf32, #tpu.memory_space<any>>) target(%57 : memref<1x128xf32, #tpu.memory_space<vmem>>) target_semaphore(%59 : memref<!tpu.dma_semaphore, #tpu.memory_space<semaphore_mem>>)
      } else {
      }
      %c0_i32_21 = arith.constant 0 : i32
      %c0_i32_22 = arith.constant 0 : i32
      %c0_i32_23 = arith.constant 0 : i32
      %24 = tpu.memref_slice %arg3[%c0_i32_22, %c0_i32_23] : memref<88x128xf32, #tpu.memory_space<any>> -> memref<1x128xf32, #tpu.memory_space<any>>
      %c0_i32_24 = arith.constant 0 : i32
      %c0_i32_25 = arith.constant 0 : i32
      %25 = tpu.memref_slice %arg5[%19, %c0_i32_24, %c0_i32_25] : memref<2x1x128xf32, #tpu.memory_space<vmem>> -> memref<1x1x128xf32, #tpu.memory_space<vmem>>
      %26 = tpu.memref_squeeze %25 : memref<1x1x128xf32, #tpu.memory_space<vmem>> -> memref<1x128xf32, #tpu.memory_space<vmem>>
      %27 = tpu.memref_slice %arg7[%19, %c0_i32_21] : memref<2x2x!tpu.dma_semaphore, #tpu.memory_space<semaphore_mem>> -> memref<1x1x!tpu.dma_semaphore, #tpu.memory_space<semaphore_mem>>
      %28 = tpu.memref_squeeze %27 : memref<1x1x!tpu.dma_semaphore, #tpu.memory_space<semaphore_mem>> -> memref<!tpu.dma_semaphore, #tpu.memory_space<semaphore_mem>>
      tpu.wait_dma2 semaphore(%28 : memref<!tpu.dma_semaphore, #tpu.memory_space<semaphore_mem>>) src(%24 : memref<1x128xf32, #tpu.memory_space<any>>) dst(%26 : memref<1x128xf32, #tpu.memory_space<vmem>>)
      %c1_i32_26 = arith.constant 1 : i32
      %c0_i32_27 = arith.constant 0 : i32
      %c0_i32_28 = arith.constant 0 : i32
      %29 = tpu.memref_slice %arg3[%c0_i32_27, %c0_i32_28] : memref<88x128xf32, #tpu.memory_space<any>> -> memref<1x128xf32, #tpu.memory_space<any>>
      %c0_i32_29 = arith.constant 0 : i32
      %c0_i32_30 = arith.constant 0 : i32
      %30 = tpu.memref_slice %arg6[%19, %c0_i32_29, %c0_i32_30] : memref<2x1x128xf32, #tpu.memory_space<vmem>> -> memref<1x1x128xf32, #tpu.memory_space<vmem>>
      %31 = tpu.memref_squeeze %30 : memref<1x1x128xf32, #tpu.memory_space<vmem>> -> memref<1x128xf32, #tpu.memory_space<vmem>>
      %32 = tpu.memref_slice %arg7[%19, %c1_i32_26] : memref<2x2x!tpu.dma_semaphore, #tpu.memory_space<semaphore_mem>> -> memref<1x1x!tpu.dma_semaphore, #tpu.memory_space<semaphore_mem>>
      %33 = tpu.memref_squeeze %32 : memref<1x1x!tpu.dma_semaphore, #tpu.memory_space<semaphore_mem>> -> memref<!tpu.dma_semaphore, #tpu.memory_space<semaphore_mem>>
      tpu.wait_dma2 semaphore(%33 : memref<!tpu.dma_semaphore, #tpu.memory_space<semaphore_mem>>) src(%29 : memref<1x128xf32, #tpu.memory_space<any>>) dst(%31 : memref<1x128xf32, #tpu.memory_space<vmem>>)
      %34 = arith.index_cast %19 : i32 to index
      %c0 = arith.constant 0 : index
      %c0_31 = arith.constant 0 : index
      %35 = vector.load %arg5[%34, %c0, %c0_31] : memref<2x1x128xf32, #tpu.memory_space<vmem>>, vector<1x1x128xf32>
      %36 = vector.shape_cast %35 : vector<1x1x128xf32> to vector<1x128xf32>
      %37 = arith.index_cast %19 : i32 to index
      %c0_32 = arith.constant 0 : index
      %c0_33 = arith.constant 0 : index
      %38 = vector.load %arg6[%37, %c0_32, %c0_33] : memref<2x1x128xf32, #tpu.memory_space<vmem>>, vector<1x1x128xf32>
      %39 = vector.shape_cast %38 : vector<1x1x128xf32> to vector<1x128xf32>
      %40 = arith.addf %36, %39 : vector<1x128xf32>
      %41 = arith.index_cast %18 : i32 to index
      %c0_34 = arith.constant 0 : index
      %42 = vector.load %arg4[%41, %c0_34] : memref<16x128xf32, #tpu.memory_space<vmem>>, vector<1x128xf32>
      tpu.vector_store %arg4[%41, %c0_34], %40 {strides = array<i32>} : memref<16x128xf32, #tpu.memory_space<vmem>>, vector<1x128xf32>,
    }
    %c16_i32_14 = arith.constant 16 : i32
    return
  }
  func.func @transform_1(%arg0: i32, %arg1: memref<16xi32, #tpu.memory_space<smem>>, %arg2: memref<16xi32, #tpu.memory_space<smem>>) -> (i32, i32) {
    %c0_i32 = arith.constant 0 : i32
    %c0_i32_0 = arith.constant 0 : i32
    return %arg0, %c0_i32 : i32, i32
  }
}

</mosaic_0001>

<llo_original>
// kernel: tpu_custom_call.1
$region0: #{tpu_custom_call.1}
  #allocation0 [shape = 'u32[]', space=smem, size = 0x4, offset = 0x4, fixed_abs, tag = 'smem constant byte address 0x4 - core index']
  #allocation1 [shape = 'u32[144,128]{1,0:T(1,128)}', space=vmem, size = 0x12000, scoped, tag = 'internal scratch']
  #allocation2 [shape = 'f32[2,1,128]{2,1,0:T(1,128)}', space=vmem, size = 0x400, scoped, tag = 'scratch operand']
  #allocation3 [shape = 'f32[2,1,128]{2,1,0:T(1,128)}', space=vmem, size = 0x400, scoped, tag = 'scratch operand']
  #allocation4 [shape = 's32[4]{0}', space=sflag, size = 0x10, scoped, tag = 'scratch operand']
  #allocation5 [shape = 's32[1]{0}', space=sflag, size = 0x4, scoped, tag = 'scoped memory for tpu_custom_call.1']
  #allocation6 [shape = 'u8[512]{0}', space=smem, size = 0x200, scoped, tag = 'prefetched SMEM operand 0']
  #allocation7 [shape = 'u8[512]{0}', space=smem, size = 0x200, scoped, tag = 'prefetched SMEM operand 1']
  #allocation10 [shape = 's32[]', space=sflag, size = 0x4, offset = 0, fixed_abs, tag = 'sflag constant byte address 0x0 - dummy sync flag']
  #allocation11 [shape = 's32[]', space=sflag, size = 0x4, offset = 0, fixed_abs, tag = 'sflag constant byte address 0x0 - dummy sync flag']
  #allocation12 [shape = 'u32[]', space=smem, size = 0x4, offset = 0x44, fixed_abs, tag = 'smem constant byte address 0x44 - assertion arg 0']
  #allocation13 [shape = 'u32[]', space=smem, size = 0x4, offset = 0x48, fixed_abs, tag = 'smem constant byte address 0x48 - assertion arg 1']
  #allocation14 [shape = 's32[]', space=sflag, size = 0x4, offset = 0, fixed_abs, tag = 'sflag constant byte address 0x0 - dummy sync flag']
  #allocation15 [shape = 's32[]', space=sflag, size = 0x4, offset = 0, fixed_abs, tag = 'sflag constant byte address 0x0 - dummy sync flag']
  #allocation16 [shape = 's32[]', space=sflag, size = 0x4, offset = 0, fixed_abs, tag = 'sflag constant byte address 0x0 - dummy sync flag']
  #allocation17 [shape = 's32[]', space=sflag, size = 0x4, offset = 0, fixed_abs, tag = 'sflag constant byte address 0x0 - dummy sync flag']
  #allocation18 [shape = 's32[]', space=sflag, size = 0x4, offset = 0, fixed_abs, tag = 'sflag constant byte address 0x0 - dummy sync flag']
  #allocation19 [shape = 's32[]', space=sflag, size = 0x4, offset = 0, fixed_abs, tag = 'sflag constant byte address 0x0 - dummy sync flag']
  %s0 = inlined_call_operand.hbm [shape: s32[16], index: 0, kind: input, shape index: {}]
  %s1 = inlined_call_operand.vmem [shape: s32[16], index: 1, kind: input, shape index: {}]
  %s2 = inlined_call_operand.hbm [shape: f32[88,128], index: 2, kind: input, shape index: {}]
  %s3 = inlined_call_operand.hbm [shape: f32[16,128], index: 3, kind: output, shape index: {}]
  %s4 = sld [smem:[#allocation0]]
  $region37: #{tpu_custom_call.1} parent=0
    _
  %s6 = ssub.s32 1, %s4
  %s7 = scalar_select 0, %s6, %s4
  %9 = dma.hbm_to_smem %s0, 16, [#allocation6], [#allocation5]
  %s10 = sshll.u32 %s1, 4
  %s11 = int_to_ptr.vmem [resolvable:$true] %s10
  %13 = dma.vmem_to_smem %s11, 16, [#allocation7], [#allocation5]
  %14 = dma.done [#allocation5], 32
  %15 = sfence
  $region1: #{tpu_custom_call.1} parent=0
    #allocation8 [shape = 'u8[8192]{0}', space=vmem, size = 0x2000, scoped, tag = 'output window, operand 0, single buffered']
    #allocation9 [shape = 's32[1]{0}', space=sflag, size = 0x4, scoped, tag = 'scoped memory for tpu_custom_call.1']
    %16 = vsyncpa [#allocation9], 0
    %s17 = smul.u32 0, 16
    %s18 = sld [smem:[#allocation6 + %s17]]
    %s19 = smul.addr %s18, 16
    %s20 = scalar_lea.hbm %s2, %s19
    // Predicated region
    $region2: #{tpu_custom_call.1} parent=1 // pred_check
      _
    $region3: #{tpu_custom_call.1} parent=1 // pred_check_branch
      %22 = sbr.rel target = $region5
    $region4: #{tpu_custom_call.1} parent=1 // pred_region
      %23 = sst [smem:[#allocation12]] [#allocation11]
      %24 = sst [smem:[#allocation13]] [#allocation10]
    $region5: #{tpu_custom_call.1} parent=1 // pred_fallthru
      _
    %26 = shalt.err (0)
    %s28 = sshll.u32 [#allocation2], 4
    %s29 = int_to_ptr.vmem [resolvable:$true] %s28
    %31 = dma.hbm_to_vmem [thread:$0]  %s20, 16, %s29, [#allocation4]
    %s32 = sld [smem:[#allocation7 + %s17]]
    %s33 = smul.addr %s32, 16
    %s34 = scalar_lea.hbm %s2, %s33
    %s35 = scalar_lea.sflag [#allocation4], 1
    // Predicated region
    $region6: #{tpu_custom_call.1} parent=1 // pred_check
      _
    $region7: #{tpu_custom_call.1} parent=1 // pred_check_branch
      %37 = sbr.rel target = $region9
    $region8: #{tpu_custom_call.1} parent=1 // pred_region
      %38 = sst [smem:[#allocation12]] [#allocation15]
      %39 = sst [smem:[#allocation13]] [#allocation14]
    $region9: #{tpu_custom_call.1} parent=1 // pred_fallthru
      _
    %41 = shalt.err (0)
    %s43 = sshll.u32 [#allocation3], 4
    %s44 = int_to_ptr.vmem [resolvable:$true] %s43
    %46 = dma.hbm_to_vmem [thread:$0]  %s34, 16, %s44, %s35
    loop: start=0, step=1, limit=16
    $region10: #{tpu_custom_call.1} parent=1 // loop_pre_header
      _
    $region11: #{tpu_custom_call.1} parent=1 // loop_header
      %s48 = sphi 0, %s52
      %p49 = scmp.ge.s32.totalorder %s48, 16
    $region12: #{tpu_custom_call.1} parent=1 // loop_header_branch
      %51 = sbr.rel (%p49) target = $region16
    $region13: #{tpu_custom_call.1} parent=1 // loop_body
      %s53 = sand.u32 %s48, 1
      %s54 = sadd.s32 %s48, 1
      %p55 = scmp.lt.s32.totalorder %s54, 16
      // Predicated region
      $region17: #{tpu_custom_call.1} parent=13 // pred_check
        %p56 = pneg %p55
      $region18: #{tpu_custom_call.1} parent=13 // pred_check_branch
        %58 = sbr.rel (%p56) target = $region20
      $region19: #{tpu_custom_call.1} parent=13 // pred_region
        %s59 = ssub.s32 1, %s53
        %s60 = sadd.s32 %s17, %s54
        %s61 = sld [smem:[#allocation6 + %s60]]
        %s62 = smul.addr %s61, 16
        %s63 = scalar_lea.hbm %s2, %s62
        %s64 = scalar_lea.vmem [#allocation2], %s59
        %s65 = smul.u32 %s59, 2
        %s66 = scalar_lea.sflag [#allocation4], %s65
        // Predicated region
        $region21: #{tpu_custom_call.1} parent=19 // pred_check
          _
        $region22: #{tpu_custom_call.1} parent=19 // pred_check_branch
          %68 = sbr.rel target = $region24
        $region23: #{tpu_custom_call.1} parent=19 // pred_region
          %69 = sst [smem:[#allocation12]] [#allocation17]
          %70 = sst [smem:[#allocation13]] [#allocation16]
        $region24: #{tpu_custom_call.1} parent=19 // pred_fallthru
          _
        %72 = shalt.err (0)
        %s74 = sshll.u32 %s64, 4
        %s75 = int_to_ptr.vmem [resolvable:$true] %s74
        %77 = dma.hbm_to_vmem [thread:$0]  %s63, 16, %s75, %s66
        %s78 = sld [smem:[#allocation7 + %s60]]
        %s79 = smul.addr %s78, 16
        %s80 = scalar_lea.hbm %s2, %s79
        %s81 = scalar_lea.vmem [#allocation3], %s59
        %s82 = sadd.s32 1, %s65
        %s83 = scalar_lea.sflag [#allocation4], %s82
        // Predicated region
        $region25: #{tpu_custom_call.1} parent=19 // pred_check
          _
        $region26: #{tpu_custom_call.1} parent=19 // pred_check_branch
          %85 = sbr.rel target = $region28
        $region27: #{tpu_custom_call.1} parent=19 // pred_region
          %86 = sst [smem:[#allocation12]] [#allocation19]
          %87 = sst [smem:[#allocation13]] [#allocation18]
        $region28: #{tpu_custom_call.1} parent=19 // pred_fallthru
          _
        %89 = shalt.err (0)
        %s91 = sshll.u32 %s81, 4
        %s92 = int_to_ptr.vmem [resolvable:$true] %s91
        %94 = dma.hbm_to_vmem [thread:$0]  %s80, 16, %s92, %s83
      $region20: #{tpu_custom_call.1} parent=13 // pred_fallthru
        _
      %s95 = scalar_lea.vmem [#allocation2], %s53
      %s96 = smul.u32 %s53, 2
      %s97 = scalar_lea.sflag [#allocation4], %s96
      %s98 = smul.u32 1, 1
      %s99 = sshll.u32 %s98, 4
      %100 = dma.done %s97, %s99
      %s101 = scalar_lea.vmem [#allocation3], %s53
      %s102 = sadd.s32 1, %s96
      %s103 = scalar_lea.sflag [#allocation4], %s102
      %s104 = sshll.u32 %s98, 4
      %105 = dma.done %s103, %s104
      %v106 = vld [vmem:[%s95] sm:$0x1]
      %v107 = vld [vmem:[%s101] sm:$0x1]
      %v108 = vadd.f32 %v106, %v107
      %s109 = scalar_lea.vmem [#allocation8], %s48
      %110 = vst [vmem:[%s109] sm:$0x1] %v108
    $region14: #{tpu_custom_call.1} parent=1 // loop_footer
      %s52 = sadd.s32 1, %s48
    $region15: #{tpu_custom_call.1} parent=1 // loop_footer_branch
      %47 = sbr.rel target = $region11
    $region16: #{tpu_custom_call.1} parent=1 // loop_exit
      _
    // Predicated region
    $region29: #{tpu_custom_call.1} parent=1 // pred_check
      _
    $region30: #{tpu_custom_call.1} parent=1 // pred_check_branch
      %112 = sbr.rel (0) target = $region32
    $region31: #{tpu_custom_call.1} parent=1 // pred_region
      %s114 = ssub.s32 256, 256
      %115 = vsyncadd [#allocation9], %s114
      %s116 = sshll.u32 [#allocation8], 4
      %s117 = int_to_ptr.vmem [resolvable:$true] %s116
      %122 = dma.vmem_to_hbm [thread:$0]  %s117, 256, %s3, [#allocation9], 128, 128, 8
    $region32: #{tpu_custom_call.1} parent=1 // pred_fallthru
      _
    // Predicated region
    $region33: #{tpu_custom_call.1} parent=1 // pred_check
      _
    $region34: #{tpu_custom_call.1} parent=1 // pred_check_branch
      %124 = sbr.rel (0) target = $region36
    $region35: #{tpu_custom_call.1} parent=1 // pred_region
      %125 = dma.done [#allocation9], 256
    $region36: #{tpu_custom_call.1} parent=1 // pred_fallthru
      _
    %126 = vsyncpa [#allocation9], 1
  %127 = vsyncmov [#allocation4]
  %s128 = vpop.sfrf %127
  %p129 = scmp.eq.s32.totalorder %s128, 0
  %p130 = pneg %p129
  %132 = shalt.err (%p130)
  %s133 = scalar_lea.sflag [#allocation4], 1
  %134 = vsyncmov %s133
  %s135 = vpop.sfrf %134
  %p136 = scmp.eq.s32.totalorder %s135, 0
  %p137 = pneg %p136
  %139 = shalt.err (%p137)
  %s140 = scalar_lea.sflag [#allocation4], 2
  %141 = vsyncmov %s140
  %s142 = vpop.sfrf %141
  %p143 = scmp.eq.s32.totalorder %s142, 0
  %p144 = pneg %p143
  %146 = shalt.err (%p144)
  %s147 = scalar_lea.sflag [#allocation4], 3
  %148 = vsyncmov %s147
  %s149 = vpop.sfrf %148
  %p150 = scmp.eq.s32.totalorder %s149, 0
  %p151 = pneg %p150
  %153 = shalt.err (%p151)

</llo_original>
